<compile_context>
chip_gen: v6e
topology: v6e:2x2x1
jax: 0.10.0
libtpu: 0.0.40
codegen_flags: <defaults>
</compile_context>

<pallas_src>
import math

import jax
import jax.numpy as jnp
from jax import lax
from jax.experimental import pallas as pl
from jax.experimental.pallas import tpu as pltpu

IN_S = 5
INTER_S = 10
OUT_S = 25

# dot_general dimension numbers (the same forms the official flash-attention kernels use).
_NT = (((1,), (1,)), ((), ()))   # A @ B^T   (contract last dim of both)
_TN = (((0,), (0,)), ((), ()))   # A^T @ B   (contract first dim of both)

# Below this many rows the fixed launch/pipeline cost dominates the <10us of work; let XLA
# fuse the two tiny matmuls instead.  (Lowered vs v1: with the HBM transposes gone the kernel
# wins much earlier.)
_PALLAS_MIN_BATCH = 1024


def _round_up(n, m):
    return ((n + m - 1) // m) * m


def mlp_kernel(x_ref, w1_ref, b1_ref, w2_ref, b2_ref, out_ref):
    # x_ref: (TB, IN_S) straight from HBM (no wrapper transpose).  Weights/biases are
    # whole-array blocks with constant index_maps -> VMEM-resident across the whole grid.
    x = x_ref[...]                                                       # (TB, 5)

    # Layer 1: h = tanh(W1 @ x^T + b1), computed lane-dense as (10, TB) via the NT matmul
    # form, so bias/tanh run on dense vregs and the EUP stays under the HBM roofline.
    h = jnp.tanh(
        lax.dot_general(w1_ref[...], x, _NT, preferred_element_type=jnp.float32)
        + b1_ref[...]
    )                                                                    # (10, TB)

    # Layer 2: a = tanh(W2 @ h + b2), still lane-dense (25, TB).
    a = jnp.tanh(
        jnp.dot(w2_ref[...], h, preferred_element_type=jnp.float32) + b2_ref[...]
    )                                                                    # (25, TB)

    # Flip back to the HBM layout (TB, 25) on the MXU: a^T = dot_general(a, I_25, TN form).
    # Exact (multiplies by 1.0/0.0) and hidden under the DMA in this mem-bound kernel.
    rows = lax.broadcasted_iota(jnp.int32, (OUT_S, OUT_S), 0)
    cols = lax.broadcasted_iota(jnp.int32, (OUT_S, OUT_S), 1)
    eye = (rows == cols).astype(jnp.float32)
    out = lax.dot_general(a, eye, _TN, preferred_element_type=jnp.float32)  # (TB, 25)

    # TODO(synk): on v7x (3.2 TB/s HBM) the single EUP port becomes co-dominant; if profiling
    # shows it binding, replace jnp.tanh with a VALU polynomial approximation.
    out_ref[...] = out.astype(out_ref.dtype)


def _choose_tile(batch, block_b):
    # Multiple of 128 rows (>= multiple of 8 required by the block layout); aim for ~8+ grid
    # steps at large batch (v7x megacore + pipelining) while capping per-step VMEM.
    target = _round_up(max((batch + 7) // 8, 1), 128)
    tb = max(128, min(block_b, target))
    # Don't let the block grow far past the array for tiny batches.
    return min(tb, _round_up(batch, 8))


def mlp_forward_pallas(x, w1, b1, w2, b2, *, block_b=8192):
    """x: (batch, IN_S) float32; w torch-style (out, in); b column vectors (out, 1).
    Returns (batch, OUT_S) float32.  No HBM-side transpose or padding of x / out."""
    batch = x.shape[0]
    tb = _choose_tile(batch, block_b)
    grid = (pl.cdiv(batch, tb),)  # partial last block: OOB rows are masked off on the store

    return pl.pallas_call(
        mlp_kernel,
        out_shape=jax.ShapeDtypeStruct((batch, OUT_S), jnp.float32),
        grid_spec=pltpu.PrefetchScalarGridSpec(
            num_scalar_prefetch=0,
            grid=grid,
            in_specs=[
                pl.BlockSpec((tb, IN_S), lambda i: (i, 0)),        # x tile (pipelined)
                pl.BlockSpec((INTER_S, IN_S), lambda i: (0, 0)),   # w1 (VMEM-resident)
                pl.BlockSpec((INTER_S, 1), lambda i: (0, 0)),      # b1
                pl.BlockSpec((OUT_S, INTER_S), lambda i: (0, 0)),  # w2
                pl.BlockSpec((OUT_S, 1), lambda i: (0, 0)),        # b2
            ],
            out_specs=pl.BlockSpec((tb, OUT_S), lambda i: (i, 0)),
        ),
        compiler_params=pltpu.CompilerParams(
            # Independent per-row work: "parallel" lets v7x shard grid steps across its two
            # TensorCores; harmless on single-core v5e/v6e.
            dimension_semantics=("parallel",),
            # x/out blocks are lane-padded in VMEM (5- and 25-wide minor dims), so give the
            # double-buffered pipeline headroom beyond the 16/32 MiB defaults.
            vmem_limit_bytes=40 * 1024 * 1024,
        ),
    )(x, w1, b1, w2, b2)


def mlp_forward_xla(x, w1, b1, w2, b2):
    # Pure-JAX reference / small-batch fast path (w is torch-style (out, in)).
    return jnp.tanh(jnp.tanh(x @ w1.T + b1.T) @ w2.T + b2.T)


def mlp_forward(x, w1, b1, w2, b2):
    # Dispatch: the Pallas kernel pays off once the batch amortizes launch + pipeline ramp-up.
    if x.shape[0] < _PALLAS_MIN_BATCH:
        return mlp_forward_xla(x, w1, b1, w2, b2)
    return mlp_forward_pallas(x, w1, b1, w2, b2)


def init_params(key):
    """Matches the PyTorch module:
    - biases: uniform_(-bInit, bInit) with bInit=0.0 -> zeros
    - weights: xavier_normal_ -> N(0, sqrt(2/(fan_in+fan_out)))
    Stored as torch-style (out, in) weight matrices and column-vector biases."""
    k1, k2 = jax.random.split(key)
    std1 = math.sqrt(2.0 / (IN_S + INTER_S))
    std2 = math.sqrt(2.0 / (INTER_S + OUT_S))
    w1 = jax.random.normal(k1, (INTER_S, IN_S), dtype=jnp.float32) * std1
    b1 = jnp.zeros((INTER_S, 1), dtype=jnp.float32)
    w2 = jax.random.normal(k2, (OUT_S, INTER_S), dtype=jnp.float32) * std2
    b2 = jnp.zeros((OUT_S, 1), dtype=jnp.float32)
    return w1, b1, w2, b2


if __name__ == "__main__":
    key = jax.random.PRNGKey(0)
    k_x, k_p = jax.random.split(key)

    # Small + ragged (not a multiple of the 128-row tile) to exercise the partial-last-block path.
    batch = 200
    x = jax.random.normal(k_x, (batch, IN_S), dtype=jnp.float32)
    w1, b1, w2, b2 = init_params(k_p)

    out = mlp_forward_pallas(x, w1, b1, w2, b2)  # exercise the kernel path directly
    out = jax.block_until_ready(out)

    ref = mlp_forward_xla(x, w1, b1, w2, b2)
    assert out.shape == (batch, OUT_S)
    assert jnp.allclose(out, ref, atol=2e-5, rtol=2e-5)

    print("KERNEL_OK")
</pallas_src>

<mosaic_0001>
module attributes {stable_mosaic.version = 11 : i64} {
  func.func @mlp_kernel(%arg0: i32, %arg1: memref<128x5xf32, #tpu.memory_space<vmem>>, %arg2: memref<10x5xf32, #tpu.memory_space<vmem>>, %arg3: memref<10x1xf32, #tpu.memory_space<vmem>>, %arg4: memref<25x10xf32, #tpu.memory_space<vmem>>, %arg5: memref<25x1xf32, #tpu.memory_space<vmem>>, %arg6: memref<128x25xf32, #tpu.memory_space<vmem>>) attributes {dimension_semantics = [#tpu.dimension_semantics<parallel>], iteration_bounds = array<i64: 2>, scalar_prefetch = 0 : i64, scratch_operands = 0 : i64, tpu.core_type = #tpu.core_type<tc>, window_params = [{transform_indices = @transform_0, window_bounds = array<i64: 128, 5>}, {pipeline_mode = #tpu.pipeline_mode<synchronous>, transform_indices = @transform_1, window_bounds = array<i64: 10, 5>}, {pipeline_mode = #tpu.pipeline_mode<synchronous>, transform_indices = @transform_2, window_bounds = array<i64: 10, 1>}, {pipeline_mode = #tpu.pipeline_mode<synchronous>, transform_indices = @transform_3, window_bounds = array<i64: 25, 10>}, {pipeline_mode = #tpu.pipeline_mode<synchronous>, transform_indices = @transform_4, window_bounds = array<i64: 25, 1>}, {transform_indices = @transform_5, window_bounds = array<i64: 128, 25>}]} {
    %c0 = arith.constant 0 : index
    %c0_0 = arith.constant 0 : index
    %0 = vector.load %arg1[%c0, %c0_0] : memref<128x5xf32, #tpu.memory_space<vmem>>, vector<128x5xf32>
    %c0_1 = arith.constant 0 : index
    %c0_2 = arith.constant 0 : index
    %1 = vector.load %arg2[%c0_1, %c0_2] : memref<10x5xf32, #tpu.memory_space<vmem>>, vector<10x5xf32>
    %cst = arith.constant dense<0.000000e+00> : vector<10x128xf32>
    %2 = tpu.matmul %1, %0, %cst {dimension_numbers = #tpu.dot_dimension_numbers<[1], [1], [0], [0], [0, 0, 1, 0], [], []>} : vector<10x5xf32>, vector<128x5xf32>, vector<10x128xf32> -> vector<10x128xf32>
    %c0_3 = arith.constant 0 : index
    %c0_4 = arith.constant 0 : index
    %3 = vector.load %arg3[%c0_3, %c0_4] : memref<10x1xf32, #tpu.memory_space<vmem>>, vector<10x1xf32>
    %4 = vector.broadcast %3 : vector<10x1xf32> to vector<10x128xf32>
    %5 = arith.addf %2, %4 : vector<10x128xf32>
    %6 = math.tanh %5 : vector<10x128xf32>
    %c0_5 = arith.constant 0 : index
    %c0_6 = arith.constant 0 : index
    %7 = vector.load %arg4[%c0_5, %c0_6] : memref<25x10xf32, #tpu.memory_space<vmem>>, vector<25x10xf32>
    %cst_7 = arith.constant dense<0.000000e+00> : vector<25x128xf32>
    %8 = tpu.matmul %7, %6, %cst_7 {dimension_numbers = #tpu.dot_dimension_numbers<[1], [0], [0], [1], [0, 0, 1, 1], [], []>} : vector<25x10xf32>, vector<10x128xf32>, vector<25x128xf32> -> vector<25x128xf32>
    %c0_8 = arith.constant 0 : index
    %c0_9 = arith.constant 0 : index
    %9 = vector.load %arg5[%c0_8, %c0_9] : memref<25x1xf32, #tpu.memory_space<vmem>>, vector<25x1xf32>
    %10 = vector.broadcast %9 : vector<25x1xf32> to vector<25x128xf32>
    %11 = arith.addf %8, %10 : vector<25x128xf32>
    %12 = math.tanh %11 : vector<25x128xf32>
    %13 = tpu.iota {dimensions = array<i32: 0>} : vector<25x25xi32>
    %14 = tpu.iota {dimensions = array<i32: 1>} : vector<25x25xi32>
    %15 = arith.cmpi eq, %13, %14 : vector<25x25xi32>
    %16 = arith.extui %15 : vector<25x25xi1> to vector<25x25xi32>
    %17 = arith.sitofp %16 : vector<25x25xi32> to vector<25x25xf32>
    %cst_10 = arith.constant dense<0.000000e+00> : vector<128x25xf32>
    %18 = tpu.matmul %12, %17, %cst_10 {dimension_numbers = #tpu.dot_dimension_numbers<[0], [0], [1], [1], [0, 1, 1, 1], [], []>} : vector<25x128xf32>, vector<25x25xf32>, vector<128x25xf32> -> vector<128x25xf32>
    %c0_11 = arith.constant 0 : index
    %c0_12 = arith.constant 0 : index
    %19 = vector.load %arg6[%c0_11, %c0_12] : memref<128x25xf32, #tpu.memory_space<vmem>>, vector<128x25xf32>
    tpu.vector_store %arg6[%c0_11, %c0_12], %18 {strides = array<i32>} : memref<128x25xf32, #tpu.memory_space<vmem>>, vector<128x25xf32>,
    return
  }
  func.func @transform_0(%arg0: i32) -> (i32, i32) {
    %c0_i32 = arith.constant 0 : i32
    %c0_i32_0 = arith.constant 0 : i32
    return %arg0, %c0_i32 : i32, i32
  }
  func.func @transform_1(%arg0: i32) -> (i32, i32) {
    %c0_i32 = arith.constant 0 : i32
    %c0_i32_0 = arith.constant 0 : i32
    %c0_i32_1 = arith.constant 0 : i32
    return %c0_i32, %c0_i32_0 : i32, i32
  }
  func.func @transform_2(%arg0: i32) -> (i32, i32) {
    %c0_i32 = arith.constant 0 : i32
    %c0_i32_0 = arith.constant 0 : i32
    %c0_i32_1 = arith.constant 0 : i32
    return %c0_i32, %c0_i32_0 : i32, i32
  }
  func.func @transform_3(%arg0: i32) -> (i32, i32) {
    %c0_i32 = arith.constant 0 : i32
    %c0_i32_0 = arith.constant 0 : i32
    %c0_i32_1 = arith.constant 0 : i32
    return %c0_i32, %c0_i32_0 : i32, i32
  }
  func.func @transform_4(%arg0: i32) -> (i32, i32) {
    %c0_i32 = arith.constant 0 : i32
    %c0_i32_0 = arith.constant 0 : i32
    %c0_i32_1 = arith.constant 0 : i32
    return %c0_i32, %c0_i32_0 : i32, i32
  }
  func.func @transform_5(%arg0: i32) -> (i32, i32) {
    %c0_i32 = arith.constant 0 : i32
    %c0_i32_0 = arith.constant 0 : i32
    return %arg0, %c0_i32 : i32, i32
  }
}

</mosaic_0001>

<llo_original>
// kernel: tpu_custom_call.1
$region0: #{tpu_custom_call.1}
  #allocation0 [shape = 'u32[]', space=smem, size = 0x4, offset = 0x4, fixed_abs, tag = 'smem constant byte address 0x4 - core index']
  #allocation1 [shape = 'u32[144,128]{1,0:T(1,128)}', space=vmem, size = 0x12000, scoped, tag = 'internal scratch']
  %s0 = inlined_call_operand.vmem [shape: f32[200,5], index: 0, kind: input, shape index: {}]
  %s1 = inlined_call_operand.vmem [shape: f32[10,5], index: 1, kind: input, shape index: {}]
  %s2 = inlined_call_operand.vmem [shape: f32[10,1], index: 2, kind: input, shape index: {}]
  %s3 = inlined_call_operand.vmem [shape: f32[25,10], index: 3, kind: input, shape index: {}]
  %s4 = inlined_call_operand.vmem [shape: f32[25,1], index: 4, kind: input, shape index: {}]
  %s5 = inlined_call_operand.vmem [shape: f32[200,25], index: 5, kind: output, shape index: {}]
  %s6 = sld [smem:[#allocation0]]
  $region101: #{tpu_custom_call.1} parent=0
    _
  %s8 = ssub.s32 1, %s6
  %s9 = scalar_select 0, %s8, %s6
  $region1: #{tpu_custom_call.1} parent=0
    #allocation2 [shape = 'u8[131072]{0}', space=vmem, size = 0x20000, scoped, tag = 'output window, operand 0']
    loop: start=0, step=1, limit=4
    $region2: #{tpu_custom_call.1} parent=1 // loop_pre_header
      _
    $region3: #{tpu_custom_call.1} parent=1 // loop_header
      %s11 = sphi 0, %s15
      %p12 = scmp.ge.s32.totalorder %s11, 4
      %s21 = sphi 0, %s23
      %s24 = sphi 0, %s21
      %s25 = sphi 0, %s24
      %s41 = sphi 0, %s25
      %s45 = sphi 0, %s45
      %s47 = sphi 0, %s45
      %s48 = sphi 0, %s47
      %s62 = sphi 0, %s48
      %s66 = sphi 0, %s66
      %s68 = sphi 0, %s66
      %s69 = sphi 0, %s68
      %s83 = sphi 0, %s69
      %s87 = sphi 0, %s87
      %s89 = sphi 0, %s87
      %s90 = sphi 0, %s89
      %s104 = sphi 0, %s90
      %s108 = sphi 0, %s108
      %s110 = sphi 0, %s108
      %s111 = sphi 0, %s110
      %s125 = sphi 0, %s111
      %s131 = sphi 0, %s133
      %s134 = sphi 0, %s131
      %s135 = sphi 0, %s134
      %s151 = sphi 0, %s135
    $region4: #{tpu_custom_call.1} parent=1 // loop_header_branch
      %14 = sbr.rel (%p12) target = $region8
    $region5: #{tpu_custom_call.1} parent=1 // loop_body
      %s16 = ssub.s32 %s11, 1
      %s17 = ssub.s32 %s11, 2
      %s18 = sadd.s32 %s11, 1
      %s19 = ssub.s32 %s11, %s18
      %p20 = scmp.eq.s32.totalorder %s19, 0
      %s22 = sadd.s32 %s21, 1
      %s23 = scalar_select %p20, %s21, %s22
      %p26 = pneg %p20
      %p27 = scmp.eq.s32.totalorder %s11, 1
      %p28 = por %p26, %p27
      %p29 = scmp.ne.s32.totalorder %s21, %s24
      %p30 = scmp.eq.s32.totalorder %s11, 0
      %p31 = por %p29, %p30
      %p32 = scmp.ne.s32.totalorder %s21, %s24
      %p33 = scmp.eq.s32.totalorder %s16, 1
      %p34 = por %p32, %p33
      %p35 = scmp.ne.s32.totalorder %s24, %s25
      %p36 = scmp.eq.s32.totalorder %s16, 0
      %p37 = por %p35, %p36
      %p38 = scmp.ne.s32.totalorder %s24, %s25
      %p39 = scmp.eq.s32.totalorder %s17, 1
      %p40 = por %p38, %p39
      %p42 = scmp.ne.s32.totalorder %s25, %s41
      %p43 = scmp.eq.s32.totalorder %s17, 0
      %p44 = por %p42, %p43
      %s46 = sadd.s32 %s45, 1
      %p49 = scmp.eq.s32.totalorder %s11, 1
      %p50 = scmp.ne.s32.totalorder %s45, %s47
      %p51 = scmp.eq.s32.totalorder %s11, 0
      %p52 = por %p50, %p51
      %p53 = scmp.ne.s32.totalorder %s45, %s47
      %p54 = scmp.eq.s32.totalorder %s16, 1
      %p55 = por %p53, %p54
      %p56 = scmp.ne.s32.totalorder %s47, %s48
      %p57 = scmp.eq.s32.totalorder %s16, 0
      %p58 = por %p56, %p57
      %p59 = scmp.ne.s32.totalorder %s47, %s48
      %p60 = scmp.eq.s32.totalorder %s17, 1
      %p61 = por %p59, %p60
      %p63 = scmp.ne.s32.totalorder %s48, %s62
      %p64 = scmp.eq.s32.totalorder %s17, 0
      %p65 = por %p63, %p64
      %s67 = sadd.s32 %s66, 1
      %p70 = scmp.eq.s32.totalorder %s11, 1
      %p71 = scmp.ne.s32.totalorder %s66, %s68
      %p72 = scmp.eq.s32.totalorder %s11, 0
      %p73 = por %p71, %p72
      %p74 = scmp.ne.s32.totalorder %s66, %s68
      %p75 = scmp.eq.s32.totalorder %s16, 1
      %p76 = por %p74, %p75
      %p77 = scmp.ne.s32.totalorder %s68, %s69
      %p78 = scmp.eq.s32.totalorder %s16, 0
      %p79 = por %p77, %p78
      %p80 = scmp.ne.s32.totalorder %s68, %s69
      %p81 = scmp.eq.s32.totalorder %s17, 1
      %p82 = por %p80, %p81
      %p84 = scmp.ne.s32.totalorder %s69, %s83
      %p85 = scmp.eq.s32.totalorder %s17, 0
      %p86 = por %p84, %p85
      %s88 = sadd.s32 %s87, 1
      %p91 = scmp.eq.s32.totalorder %s11, 1
      %p92 = scmp.ne.s32.totalorder %s87, %s89
      %p93 = scmp.eq.s32.totalorder %s11, 0
      %p94 = por %p92, %p93
      %p95 = scmp.ne.s32.totalorder %s87, %s89
      %p96 = scmp.eq.s32.totalorder %s16, 1
      %p97 = por %p95, %p96
      %p98 = scmp.ne.s32.totalorder %s89, %s90
      %p99 = scmp.eq.s32.totalorder %s16, 0
      %p100 = por %p98, %p99
      %p101 = scmp.ne.s32.totalorder %s89, %s90
      %p102 = scmp.eq.s32.totalorder %s17, 1
      %p103 = por %p101, %p102
      %p105 = scmp.ne.s32.totalorder %s90, %s104
      %p106 = scmp.eq.s32.totalorder %s17, 0
      %p107 = por %p105, %p106
      %s109 = sadd.s32 %s108, 1
      %p112 = scmp.eq.s32.totalorder %s11, 1
      %p113 = scmp.ne.s32.totalorder %s108, %s110
      %p114 = scmp.eq.s32.totalorder %s11, 0
      %p115 = por %p113, %p114
      %p116 = scmp.ne.s32.totalorder %s108, %s110
      %p117 = scmp.eq.s32.totalorder %s16, 1
      %p118 = por %p116, %p117
      %p119 = scmp.ne.s32.totalorder %s110, %s111
      %p120 = scmp.eq.s32.totalorder %s16, 0
      %p121 = por %p119, %p120
      %p122 = scmp.ne.s32.totalorder %s110, %s111
      %p123 = scmp.eq.s32.totalorder %s17, 1
      %p124 = por %p122, %p123
      %p126 = scmp.ne.s32.totalorder %s111, %s125
      %p127 = scmp.eq.s32.totalorder %s17, 0
      %p128 = por %p126, %p127
      %s129 = ssub.s32 %s11, %s18
      %p130 = scmp.eq.s32.totalorder %s129, 0
      %s132 = sadd.s32 %s131, 1
      %s133 = scalar_select %p130, %s131, %s132
      %p136 = pneg %p130
      %p137 = scmp.eq.s32.totalorder %s11, 1
      %p138 = por %p136, %p137
      %p139 = scmp.ne.s32.totalorder %s131, %s134
      %p140 = scmp.eq.s32.totalorder %s11, 0
      %p141 = por %p139, %p140
      %p142 = scmp.ne.s32.totalorder %s131, %s134
      %p143 = scmp.eq.s32.totalorder %s16, 1
      %p144 = por %p142, %p143
      %p145 = scmp.ne.s32.totalorder %s134, %s135
      %p146 = scmp.eq.s32.totalorder %s16, 0
      %p147 = por %p145, %p146
      %p148 = scmp.ne.s32.totalorder %s134, %s135
      %p149 = scmp.eq.s32.totalorder %s17, 1
      %p150 = por %p148, %p149
      %p152 = scmp.ne.s32.totalorder %s135, %s151
      %p153 = scmp.eq.s32.totalorder %s17, 0
      %p154 = por %p152, %p153
      %p155 = scmp.le.s32.totalorder 1, %s11
      %p156 = scmp.lt.s32.totalorder %s11, 3
      %p157 = pnand %p155, %p156
      %p158 = pneg %p157
      // Predicated region
      $region9: #{tpu_custom_call.1} parent=5 // pred_check
        _
      $region10: #{tpu_custom_call.1} parent=5 // pred_check_branch
        %160 = sbr.rel (%p157) target = $region12
      $region11: #{tpu_custom_call.1} parent=5 // pred_region
        %s161 = ssub.s32 %s11, 1
        // Predicated region
        $region13: #{tpu_custom_call.1} parent=11 // pred_check
          %p162 = pneg %p58
        $region14: #{tpu_custom_call.1} parent=11 // pred_check_branch
          %164 = sbr.rel (%p162) target = $region16
        $region15: #{tpu_custom_call.1} parent=11 // pred_region
          _
        $region16: #{tpu_custom_call.1} parent=11 // pred_fallthru
          _
        // Predicated region
        $region17: #{tpu_custom_call.1} parent=11 // pred_check
          %p165 = pneg %p79
        $region18: #{tpu_custom_call.1} parent=11 // pred_check_branch
          %167 = sbr.rel (%p165) target = $region20
        $region19: #{tpu_custom_call.1} parent=11 // pred_region
          _
        $region20: #{tpu_custom_call.1} parent=11 // pred_fallthru
          _
        // Predicated region
        $region21: #{tpu_custom_call.1} parent=11 // pred_check
          %p168 = pneg %p100
        $region22: #{tpu_custom_call.1} parent=11 // pred_check_branch
          %170 = sbr.rel (%p168) target = $region24
        $region23: #{tpu_custom_call.1} parent=11 // pred_region
          _
        $region24: #{tpu_custom_call.1} parent=11 // pred_fallthru
          _
        // Predicated region
        $region25: #{tpu_custom_call.1} parent=11 // pred_check
          %p171 = pneg %p121
        $region26: #{tpu_custom_call.1} parent=11 // pred_check_branch
          %173 = sbr.rel (%p171) target = $region28
        $region27: #{tpu_custom_call.1} parent=11 // pred_region
          _
        $region28: #{tpu_custom_call.1} parent=11 // pred_fallthru
          _
      $region12: #{tpu_custom_call.1} parent=5 // pred_fallthru
        _
      %p174 = scmp.lt.s32.totalorder %s11, 2
      // Predicated region
      $region29: #{tpu_custom_call.1} parent=5 // pred_check
        %p175 = pneg %p174
      $region30: #{tpu_custom_call.1} parent=5 // pred_check_branch
        %177 = sbr.rel (%p175) target = $region32
      $region31: #{tpu_custom_call.1} parent=5 // pred_region
        // Predicated region
        $region33: #{tpu_custom_call.1} parent=31 // pred_check
          %p178 = pneg %p31
        $region34: #{tpu_custom_call.1} parent=31 // pred_check_branch
          %180 = sbr.rel (%p178) target = $region36
        $region35: #{tpu_custom_call.1} parent=31 // pred_region
          %s181 = smul.u32 16, %s11
          %s182 = ssub.s32 25, %s181
          %p183 = scmp.lt.s32.totalorder %s182, 16
          %s184 = scalar_select %p183, %s182, 16
          %s185 = smul.u32 128, %s184
          %p186 = scmp.lt.s32.totalorder %s181, 24
          %s187 = scalar_select %p186, %s181, 24
          %s188 = smul.addr %s187, 8
          %s189 = scalar_lea.vmem %s0, %s188
          %s190 = smul.u32 16, %s11
          %s191 = ssub.s32 25, %s190
          %p192 = scmp.lt.s32.totalorder %s191, 16
          %s193 = scalar_select %p192, %s191, 16
          %s194 = smul.u32 128, %s193
        $region36: #{tpu_custom_call.1} parent=31 // pred_fallthru
          _
      $region32: #{tpu_custom_call.1} parent=5 // pred_fallthru
        _
      %p195 = scmp.le.s32.totalorder 1, %s11
      %p196 = scmp.lt.s32.totalorder %s11, 3
      %p197 = pnand %p195, %p196
      %p198 = pneg %p197
      // Predicated region
      $region37: #{tpu_custom_call.1} parent=5 // pred_check
        _
      $region38: #{tpu_custom_call.1} parent=5 // pred_check_branch
        %200 = sbr.rel (%p197) target = $region40
      $region39: #{tpu_custom_call.1} parent=5 // pred_region
        %s201 = ssub.s32 %s11, 1
        %s202 = smul.u32 16, %s16
        %s203 = ssub.s32 25, %s202
        %p204 = scmp.lt.s32.totalorder %s203, 16
        %s205 = scalar_select %p204, %s203, 16
        %s206 = smul.u32 128, %s205
        %p207 = scmp.lt.s32.totalorder %s202, 24
        %s208 = scalar_select %p207, %s202, 24
        %s209 = smul.addr %s208, 8
        %s210 = scalar_lea.vmem %s0, %s209
        %p211 = pneg %p37
        %p212 = pneg %p34
        %p213 = pneg %p58
        %p214 = pneg %p55
        %p215 = pneg %p79
        %p216 = pneg %p76
        %p217 = pneg %p100
        %p218 = pneg %p97
        %p219 = pneg %p121
        %p220 = pneg %p118
        %p221 = pneg %p147
        %p222 = pneg %p144
        %s223 = sand.u32 %s134, 1
        %s224 = sand.u32 %s134, 1
        %s225 = smul.addr %s224, 128
        %s226 = scalar_lea.vmem [#allocation2], %s225
        %s227 = smul.u32 16, %s16
        %s228 = ssub.s32 25, %s227
        %p229 = scmp.lt.s32.totalorder %s228, 16
        %s230 = scalar_select %p229, %s228, 16
        %s231 = smul.u32 128, %s230
        %p232 = scmp.lt.s32.totalorder %s227, 24
        %s233 = scalar_select %p232, %s227, 24
        %s234 = smul.addr %s233, 8
        %s235 = scalar_lea.vmem %s0, %s234
        %s236 = smul.u32 16, %s16
        %s237 = ssub.s32 25, %s236
        %p238 = scmp.lt.s32.totalorder %s237, 16
        %s239 = scalar_select %p238, %s237, 16
        %s240 = smul.u32 128, %s239
        %s241 = smul.u32 16, %s16
        %s242 = ssub.s32 25, %s241
        %p243 = scmp.lt.s32.totalorder %s242, 16
        %s244 = scalar_select %p243, %s242, 16
        %s245 = smul.u32 128, %s244
        %v246 = vld [vmem:[%s235] sm:$0xff]
        %v247 = vld [vmem:[%s235 + $0x8] sm:$0xff]
        %v248 = vld [vmem:[%s235 + $0x10] sm:$0xff]
        %v249 = vld [vmem:[%s235 + $0x18] sm:$0xff]
        %v250 = vld [vmem:[%s235 + $0x20] sm:$0xff]
        %v251 = vld [vmem:[%s235 + $0x28] sm:$0xff]
        %v252 = vld [vmem:[%s235 + $0x30] sm:$0xff]
        %v253 = vld [vmem:[%s235 + $0x38] sm:$0xff]
        %v254 = vld [vmem:[%s235 + $0x40] sm:$0xff]
        %v255 = vld [vmem:[%s235 + $0x48] sm:$0xff]
        %v256 = vld [vmem:[%s235 + $0x50] sm:$0xff]
        %v257 = vld [vmem:[%s235 + $0x58] sm:$0xff]
        %v258 = vld [vmem:[%s235 + $0x60] sm:$0xff]
        %v259 = vld [vmem:[%s235 + $0x68] sm:$0xff]
        %v260 = vld [vmem:[%s235 + $0x70] sm:$0xff]
        %v261 = vld [vmem:[%s235 + $0x78] sm:$0xff]
        %v262 = vld [vmem:[%s1] sm:$0xff]
        %v263 = vld [vmem:[%s1 + $0x8] sm:$0x3]
        %v264 = vld [vmem:[%s2] sm:$0xff]
        %v265 = vld [vmem:[%s2 + $0x8] sm:$0x3]
        %267 = vset.pattern.permute.xlu0 0
        %268 = vperm.xlu0 %267, %v264
        %v269 = vpop.permute.xlu0 %268
        %272 = vset.pattern.permute.xlu0 0
        %273 = vperm.xlu0 %272, %v265
        %v274 = vpop.permute.xlu0 %273
        %vm276 = vcmask 39936
        %v278 = vsel %vm276, %v262, 0
        %v281 = vsel %vm276, %v263, 0
        %v284 = vsel %vm276, %v246, 0
        %v287 = vsel %vm276, %v247, 0
        %v290 = vsel %vm276, %v248, 0
        %v293 = vsel %vm276, %v249, 0
        %v296 = vsel %vm276, %v250, 0
        %v299 = vsel %vm276, %v251, 0
        %v302 = vsel %vm276, %v252, 0
        %v305 = vsel %vm276, %v253, 0
        %v308 = vsel %vm276, %v254, 0
        %v311 = vsel %vm276, %v255, 0
        %v314 = vsel %vm276, %v256, 0
        %v317 = vsel %vm276, %v257, 0
        %v320 = vsel %vm276, %v258, 0
        %v323 = vsel %vm276, %v259, 0
        %v326 = vsel %vm276, %v260, 0
        %v329 = vsel %vm276, %v261, 0
        %331 = vmatprep.subr.mxu0 0.0
        %332 = vmatpush1.xpose.msra.mxu0 %v329
        %333 = vmatprep.subr.mxu0 0.0
        %334 = vmatpush1.xpose.msra.mxu0 %v326
        %335 = vmatprep.subr.mxu0 0.0
        %336 = vmatpush1.xpose.msra.mxu0 %v323
        %337 = vmatprep.subr.mxu0 0.0
        %338 = vmatpush1.xpose.msra.mxu0 %v320
        %339 = vmatprep.subr.mxu0 0.0
        %340 = vmatpush1.xpose.msra.mxu0 %v317
        %341 = vmatprep.subr.mxu0 0.0
        %342 = vmatpush1.xpose.msra.mxu0 %v314
        %343 = vmatprep.subr.mxu0 0.0
        %344 = vmatpush1.xpose.msra.mxu0 %v311
        %345 = vmatprep.subr.mxu0 0.0
        %346 = vmatpush1.xpose.msra.mxu0 %v308
        %347 = vmatprep.subr.mxu0 0.0
        %348 = vmatpush1.xpose.msra.mxu0 %v305
        %349 = vmatprep.subr.mxu0 0.0
        %350 = vmatpush1.xpose.msra.mxu0 %v302
        %351 = vmatprep.subr.mxu0 0.0
        %352 = vmatpush1.xpose.msra.mxu0 %v299
        %353 = vmatprep.subr.mxu0 0.0
        %354 = vmatpush1.xpose.msra.mxu0 %v296
        %355 = vmatprep.subr.mxu0 0.0
        %356 = vmatpush1.xpose.msra.mxu0 %v293
        %357 = vmatprep.subr.mxu0 0.0
        %358 = vmatpush1.xpose.msra.mxu0 %v290
        %359 = vmatprep.subr.mxu0 0.0
        %360 = vmatpush1.xpose.msra.mxu0 %v287
        %361 = vmatprep.subr.mxu0 0.0
        %362 = vmatpush1.xpose.msra.mxu0 %v284
        %363 = vmatprep.subr.mxu0 0.0
        %364 = vmatpush2.xpose.msra.mxu0 0.0
        %365 = vmatprep.subr.mxu0 0.0
        %366 = vmatpush2.xpose.msra.mxu0 0.0
        %367 = vmatprep.subr.mxu0 0.0
        %368 = vmatpush2.xpose.msra.mxu0 0.0
        %369 = vmatprep.subr.mxu0 0.0
        %370 = vmatpush2.xpose.msra.mxu0 0.0
        %371 = vmatprep.subr.mxu0 0.0
        %372 = vmatpush2.xpose.msra.mxu0 0.0
        %373 = vmatprep.subr.mxu0 0.0
        %374 = vmatpush2.xpose.msra.mxu0 0.0
        %375 = vmatprep.subr.mxu0 0.0
        %376 = vmatpush2.xpose.msra.mxu0 0.0
        %377 = vmatprep.subr.mxu0 0.0
        %378 = vmatpush2.xpose.msra.mxu0 0.0
        %379 = vmatprep.subr.mxu0 0.0
        %380 = vmatpush2.xpose.msra.mxu0 0.0
        %381 = vmatprep.subr.mxu0 0.0
        %382 = vmatpush2.xpose.msra.mxu0 0.0
        %383 = vmatprep.subr.mxu0 0.0
        %384 = vmatpush2.xpose.msra.mxu0 0.0
        %385 = vmatprep.subr.mxu0 0.0
        %386 = vmatpush2.xpose.msra.mxu0 0.0
        %387 = vmatprep.subr.mxu0 0.0
        %388 = vmatpush2.xpose.msra.mxu0 0.0
        %389 = vmatprep.subr.mxu0 0.0
        %390 = vmatpush2.xpose.msra.mxu0 0.0
        %391 = vmatprep.subr.mxu0 0.0
        %392 = vmatpush2.xpose.msra.mxu0 0.0
        %393 = vmatprep.subr.mxu0 0.0
        %394 = vmatpush2.xpose.msra.mxu0 0.0
        %395 = vmatprep.mubr.f32.mxu0 0.0
        %396 = vmatmul.mubr.f32.gmra.mxu0 %v278
        %v397 = vpop.f32.mrf.mxu0
        %v398 = vadd.f32 %v269, %v397
        %v399 = vpop.f32.mrf.mxu0
        %400 = vmatprep.mubr.f32.mxu0 0.0
        %401 = vmatmul.mubr.f32.gmra.mxu0 %v281
        %v402 = vpop.f32.mrf.mxu0
        %v403 = vadd.f32 %v274, %v402
        %v404 = vpop.f32.mrf.mxu0
        %405 = vdwg.mxu0
        %v406 = vtanh.pop %v398
        %v407 = vtanh.pop %v403
        %v408 = vld [vmem:[%s3] sm:$0xff]
        %v409 = vld [vmem:[%s3 + $0x8] sm:$0xff]
        %v410 = vld [vmem:[%s3 + $0x10] sm:$0xff]
        %v411 = vld [vmem:[%s3 + $0x18] sm:$0x1]
        %v412 = vld [vmem:[%s4] sm:$0xff]
        %v413 = vld [vmem:[%s4 + $0x8] sm:$0xff]
        %v414 = vld [vmem:[%s4 + $0x10] sm:$0xff]
        %v415 = vld [vmem:[%s4 + $0x18] sm:$0x1]
        %417 = vset.pattern.permute.xlu0 0
        %418 = vperm.xlu0 %417, %v412
        %v419 = vpop.permute.xlu0 %418
        %422 = vset.pattern.permute.xlu0 0
        %423 = vperm.xlu0 %422, %v413
        %v424 = vpop.permute.xlu0 %423
        %427 = vset.pattern.permute.xlu0 0
        %428 = vperm.xlu0 %427, %v414
        %v429 = vpop.permute.xlu0 %428
        %432 = vset.pattern.permute.xlu0 0
        %433 = vperm.xlu0 %432, %v415
        %v434 = vpop.permute.xlu0 %433
        %vm436 = vcmask 80896
        %v438 = vsel %vm436, %v408, 0
        %v441 = vsel %vm436, %v409, 0
        %v444 = vsel %vm436, %v410, 0
        %v447 = vsel %vm436, %v411, 0
        %vm449 = vcmask 1041408
        %v451 = vsel %vm449, %v407, 0
        %453 = vmatprep.subr.mxu0 0.0
        %454 = vmatpush1.msra.mxu0 0.0
        %455 = vmatprep.subr.mxu0 0.0
        %456 = vmatpush1.msra.mxu0 0.0
        %457 = vmatprep.subr.mxu0 0.0
        %458 = vmatpush1.msra.mxu0 0.0
        %459 = vmatprep.subr.mxu0 0.0
        %460 = vmatpush1.msra.mxu0 0.0
        %461 = vmatprep.subr.mxu0 0.0
        %462 = vmatpush1.msra.mxu0 0.0
        %463 = vmatprep.subr.mxu0 0.0
        %464 = vmatpush1.msra.mxu0 0.0
        %465 = vmatprep.subr.mxu0 0.0
        %466 = vmatpush1.msra.mxu0 0.0
        %467 = vmatprep.subr.mxu0 0.0
        %468 = vmatpush1.msra.mxu0 0.0
        %469 = vmatprep.subr.mxu0 0.0
        %470 = vmatpush1.msra.mxu0 0.0
        %471 = vmatprep.subr.mxu0 0.0
        %472 = vmatpush1.msra.mxu0 0.0
        %473 = vmatprep.subr.mxu0 0.0
        %474 = vmatpush1.msra.mxu0 0.0
        %475 = vmatprep.subr.mxu0 0.0
        %476 = vmatpush1.msra.mxu0 0.0
        %477 = vmatprep.subr.mxu0 0.0
        %478 = vmatpush1.msra.mxu0 0.0
        %479 = vmatprep.subr.mxu0 0.0
        %480 = vmatpush1.msra.mxu0 0.0
        %481 = vmatprep.subr.mxu0 0.0
        %482 = vmatpush1.msra.mxu0 %v451
        %483 = vmatprep.subr.mxu0 0.0
        %484 = vmatpush1.msra.mxu0 %v406
        %485 = vmatprep.subr.mxu0 0.0
        %486 = vmatpush2.msra.mxu0 0.0
        %487 = vmatprep.subr.mxu0 0.0
        %488 = vmatpush2.msra.mxu0 0.0
        %489 = vmatprep.subr.mxu0 0.0
        %490 = vmatpush2.msra.mxu0 0.0
        %491 = vmatprep.subr.mxu0 0.0
        %492 = vmatpush2.msra.mxu0 0.0
        %493 = vmatprep.subr.mxu0 0.0
        %494 = vmatpush2.msra.mxu0 0.0
        %495 = vmatprep.subr.mxu0 0.0
        %496 = vmatpush2.msra.mxu0 0.0
        %497 = vmatprep.subr.mxu0 0.0
        %498 = vmatpush2.msra.mxu0 0.0
        %499 = vmatprep.subr.mxu0 0.0
        %500 = vmatpush2.msra.mxu0 0.0
        %501 = vmatprep.subr.mxu0 0.0
        %502 = vmatpush2.msra.mxu0 0.0
        %503 = vmatprep.subr.mxu0 0.0
        %504 = vmatpush2.msra.mxu0 0.0
        %505 = vmatprep.subr.mxu0 0.0
        %506 = vmatpush2.msra.mxu0 0.0
        %507 = vmatprep.subr.mxu0 0.0
        %508 = vmatpush2.msra.mxu0 0.0
        %509 = vmatprep.subr.mxu0 0.0
        %510 = vmatpush2.msra.mxu0 0.0
        %511 = vmatprep.subr.mxu0 0.0
        %512 = vmatpush2.msra.mxu0 0.0
        %513 = vmatprep.subr.mxu0 0.0
        %514 = vmatpush2.msra.mxu0 0.0
        %515 = vmatprep.subr.mxu0 0.0
        %516 = vmatpush2.msra.mxu0 0.0
        %517 = vmatprep.mubr.f32.mxu0 0.0
        %518 = vmatmul.mubr.f32.gmra.mxu0 %v438
        %v519 = vpop.f32.mrf.mxu0
        %v520 = vadd.f32 %v419, %v519
        %v521 = vpop.f32.mrf.mxu0
        %522 = vmatprep.mubr.f32.mxu0 0.0
        %523 = vmatmul.mubr.f32.gmra.mxu0 %v441
        %v524 = vpop.f32.mrf.mxu0
        %v525 = vadd.f32 %v424, %v524
        %v526 = vpop.f32.mrf.mxu0
        %527 = vmatprep.mubr.f32.mxu0 0.0
        %528 = vmatmul.mubr.f32.gmra.mxu0 %v444
        %v529 = vpop.f32.mrf.mxu0
        %v530 = vadd.f32 %v429, %v529
        %v531 = vpop.f32.mrf.mxu0
        %532 = vmatprep.mubr.f32.mxu0 0.0
        %533 = vmatmul.mubr.f32.gmra.mxu0 %v447
        %v534 = vpop.f32.mrf.mxu0
        %v535 = vadd.f32 %v434, %v534
        %v536 = vpop.f32.mrf.mxu0
        %537 = vdwg.mxu0
        %v538 = vtanh.pop %v520
        %v539 = vtanh.pop %v525
        %v540 = vtanh.pop %v530
        %v541 = vtanh.pop %v535
        %v542 = vlaneseq
        %v543 = vshrl.u32 %v542, 7
        %v544 = vadd.s32 %v543, 8
        %v545 = vadd.s32 %v543, 16
        %v546 = vadd.s32 %v543, 24
        %v547 = vlaneseq
        %v548 = vand.u32 %v547, 127
        %vm549 = vcmp.eq.s32.totalorder %v543, %v548
        %vm550 = vcmp.eq.s32.totalorder %v544, %v548
        %vm551 = vcmp.eq.s32.totalorder %v545, %v548
        %vm552 = vcmp.eq.s32.totalorder %v546, %v548
        %v553 = vsel %vm549, 1, 0
        %v554 = vsel %vm550, 1, 0
        %v555 = vsel %vm551, 1, 0
        %v556 = vsel %vm552, 1, 0
        %v557 = vcvt.s32.f32 %v553
        %v558 = vcvt.s32.f32 %v554
        %v559 = vcvt.s32.f32 %v555
        %v560 = vcvt.s32.f32 %v556
        %561 = vxpose.xlu0.b32.start [1/16] %v538, 128
        %562 = vxpose.xlu0.b32.cont [2/16] %v539, 128
        %563 = vxpose.xlu0.b32.cont [3/16] %v540, 128
        %564 = vxpose.xlu0.b32.cont [4/16] %v541, 128
        %565 = vxpose.xlu0.b32.cont [5/16] 0.0, 128
        %566 = vxpose.xlu0.b32.cont [6/16] 0.0, 128
        %567 = vxpose.xlu0.b32.cont [7/16] 0.0, 128
        %568 = vxpose.xlu0.b32.cont [8/16] 0.0, 128
        %569 = vxpose.xlu0.b32.cont [9/16] 0.0, 128
        %570 = vxpose.xlu0.b32.cont [10/16] 0.0, 128
        %571 = vxpose.xlu0.b32.cont [11/16] 0.0, 128
        %572 = vxpose.xlu0.b32.cont [12/16] 0.0, 128
        %573 = vxpose.xlu0.b32.cont [13/16] 0.0, 128
        %574 = vxpose.xlu0.b32.cont [14/16] 0.0, 128
        %575 = vxpose.xlu0.b32.cont [15/16] 0.0, 128
        %576 = vxpose.xlu0.b32.end [16/16] 0.0, 128
        %v577 = vpop.trf.xlu0
        %v578 = vpop.trf.xlu0
        %v579 = vpop.trf.xlu0
        %v580 = vpop.trf.xlu0
        %v581 = vpop.trf.xlu0
        %v582 = vpop.trf.xlu0
        %v583 = vpop.trf.xlu0
        %v584 = vpop.trf.xlu0
        %v585 = vpop.trf.xlu0
        %v586 = vpop.trf.xlu0
        %v587 = vpop.trf.xlu0
        %v588 = vpop.trf.xlu0
        %v589 = vpop.trf.xlu0
        %v590 = vpop.trf.xlu0
        %v591 = vpop.trf.xlu0
        %v592 = vpop.trf.xlu0
        %vm593 = vcmask 203776
        %v595 = vsel %vm593, %v577, 0
        %v598 = vsel %vm593, %v578, 0
        %v601 = vsel %vm593, %v579, 0
        %v604 = vsel %vm593, %v580, 0
        %v607 = vsel %vm593, %v581, 0
        %v610 = vsel %vm593, %v582, 0
        %v613 = vsel %vm593, %v583, 0
        %v616 = vsel %vm593, %v584, 0
        %v619 = vsel %vm593, %v585, 0
        %v622 = vsel %vm593, %v586, 0
        %v625 = vsel %vm593, %v587, 0
        %v628 = vsel %vm593, %v588, 0
        %v631 = vsel %vm593, %v589, 0
        %v634 = vsel %vm593, %v590, 0
        %v637 = vsel %vm593, %v591, 0
        %v640 = vsel %vm593, %v592, 0
        %vm642 = vcmask 1040384
        %v644 = vsel %vm642, %v560, 0
        %646 = vmatprep.subr.mxu0 0.0
        %647 = vmatpush1.msra.mxu0 0.0
        %648 = vmatprep.subr.mxu0 0.0
        %649 = vmatpush1.msra.mxu0 0.0
        %650 = vmatprep.subr.mxu0 0.0
        %651 = vmatpush1.msra.mxu0 0.0
        %652 = vmatprep.subr.mxu0 0.0
        %653 = vmatpush1.msra.mxu0 0.0
        %654 = vmatprep.subr.mxu0 0.0
        %655 = vmatpush1.msra.mxu0 0.0
        %656 = vmatprep.subr.mxu0 0.0
        %657 = vmatpush1.msra.mxu0 0.0
        %658 = vmatprep.subr.mxu0 0.0
        %659 = vmatpush1.msra.mxu0 0.0
        %660 = vmatprep.subr.mxu0 0.0
        %661 = vmatpush1.msra.mxu0 0.0
        %662 = vmatprep.subr.mxu0 0.0
        %663 = vmatpush1.msra.mxu0 0.0
        %664 = vmatprep.subr.mxu0 0.0
        %665 = vmatpush1.msra.mxu0 0.0
        %666 = vmatprep.subr.mxu0 0.0
        %667 = vmatpush1.msra.mxu0 0.0
        %668 = vmatprep.subr.mxu0 0.0
        %669 = vmatpush1.msra.mxu0 0.0
        %670 = vmatprep.subr.mxu0 0.0
        %671 = vmatpush1.msra.mxu0 %v644
        %672 = vmatprep.subr.mxu0 0.0
        %673 = vmatpush1.msra.mxu0 %v559
        %674 = vmatprep.subr.mxu0 0.0
        %675 = vmatpush1.msra.mxu0 %v558
        %676 = vmatprep.subr.mxu0 0.0
        %677 = vmatpush1.msra.mxu0 %v557
        %678 = vmatprep.subr.mxu0 0.0
        %679 = vmatpush2.msra.mxu0 0.0
        %680 = vmatprep.subr.mxu0 0.0
        %681 = vmatpush2.msra.mxu0 0.0
        %682 = vmatprep.subr.mxu0 0.0
        %683 = vmatpush2.msra.mxu0 0.0
        %684 = vmatprep.subr.mxu0 0.0
        %685 = vmatpush2.msra.mxu0 0.0
        %686 = vmatprep.subr.mxu0 0.0
        %687 = vmatpush2.msra.mxu0 0.0
        %688 = vmatprep.subr.mxu0 0.0
        %689 = vmatpush2.msra.mxu0 0.0
        %690 = vmatprep.subr.mxu0 0.0
        %691 = vmatpush2.msra.mxu0 0.0
        %692 = vmatprep.subr.mxu0 0.0
        %693 = vmatpush2.msra.mxu0 0.0
        %694 = vmatprep.subr.mxu0 0.0
        %695 = vmatpush2.msra.mxu0 0.0
        %696 = vmatprep.subr.mxu0 0.0
        %697 = vmatpush2.msra.mxu0 0.0
        %698 = vmatprep.subr.mxu0 0.0
        %699 = vmatpush2.msra.mxu0 0.0
        %700 = vmatprep.subr.mxu0 0.0
        %701 = vmatpush2.msra.mxu0 0.0
        %702 = vmatprep.subr.mxu0 0.0
        %703 = vmatpush2.msra.mxu0 0.0
        %704 = vmatprep.subr.mxu0 0.0
        %705 = vmatpush2.msra.mxu0 0.0
        %706 = vmatprep.subr.mxu0 0.0
        %707 = vmatpush2.msra.mxu0 0.0
        %708 = vmatprep.subr.mxu0 0.0
        %709 = vmatpush2.msra.mxu0 0.0
        %710 = vmatprep.mubr.f32.mxu0 0.0
        %711 = vmatmul.mubr.f32.gmra.mxu0 %v595
        %v712 = vpop.f32.mrf.mxu0
        %v713 = vadd.f32 0.0, %v712
        %v714 = vpop.f32.mrf.mxu0
        %715 = vmatprep.mubr.f32.mxu0 0.0
        %716 = vmatmul.mubr.f32.gmra.mxu0 %v598
        %v717 = vpop.f32.mrf.mxu0
        %v718 = vadd.f32 0.0, %v717
        %v719 = vpop.f32.mrf.mxu0
        %720 = vmatprep.mubr.f32.mxu0 0.0
        %721 = vmatmul.mubr.f32.gmra.mxu0 %v601
        %v722 = vpop.f32.mrf.mxu0
        %v723 = vadd.f32 0.0, %v722
        %v724 = vpop.f32.mrf.mxu0
        %725 = vmatprep.mubr.f32.mxu0 0.0
        %726 = vmatmul.mubr.f32.gmra.mxu0 %v604
        %v727 = vpop.f32.mrf.mxu0
        %v728 = vadd.f32 0.0, %v727
        %v729 = vpop.f32.mrf.mxu0
        %730 = vmatprep.mubr.f32.mxu0 0.0
        %731 = vmatmul.mubr.f32.gmra.mxu0 %v607
        %v732 = vpop.f32.mrf.mxu0
        %v733 = vadd.f32 0.0, %v732
        %v734 = vpop.f32.mrf.mxu0
        %735 = vmatprep.mubr.f32.mxu0 0.0
        %736 = vmatmul.mubr.f32.gmra.mxu0 %v610
        %v737 = vpop.f32.mrf.mxu0
        %v738 = vadd.f32 0.0, %v737
        %v739 = vpop.f32.mrf.mxu0
        %740 = vmatprep.mubr.f32.mxu0 0.0
        %741 = vmatmul.mubr.f32.gmra.mxu0 %v613
        %v742 = vpop.f32.mrf.mxu0
        %v743 = vadd.f32 0.0, %v742
        %v744 = vpop.f32.mrf.mxu0
        %745 = vmatprep.mubr.f32.mxu0 0.0
        %746 = vmatmul.mubr.f32.gmra.mxu0 %v616
        %v747 = vpop.f32.mrf.mxu0
        %v748 = vadd.f32 0.0, %v747
        %v749 = vpop.f32.mrf.mxu0
        %750 = vmatprep.mubr.f32.mxu0 0.0
        %751 = vmatmul.mubr.f32.gmra.mxu0 %v619
        %v752 = vpop.f32.mrf.mxu0
        %v753 = vadd.f32 0.0, %v752
        %v754 = vpop.f32.mrf.mxu0
        %755 = vmatprep.mubr.f32.mxu0 0.0
        %756 = vmatmul.mubr.f32.gmra.mxu0 %v622
        %v757 = vpop.f32.mrf.mxu0
        %v758 = vadd.f32 0.0, %v757
        %v759 = vpop.f32.mrf.mxu0
        %760 = vmatprep.mubr.f32.mxu0 0.0
        %761 = vmatmul.mubr.f32.gmra.mxu0 %v625
        %v762 = vpop.f32.mrf.mxu0
        %v763 = vadd.f32 0.0, %v762
        %v764 = vpop.f32.mrf.mxu0
        %765 = vmatprep.mubr.f32.mxu0 0.0
        %766 = vmatmul.mubr.f32.gmra.mxu0 %v628
        %v767 = vpop.f32.mrf.mxu0
        %v768 = vadd.f32 0.0, %v767
        %v769 = vpop.f32.mrf.mxu0
        %770 = vmatprep.mubr.f32.mxu0 0.0
        %771 = vmatmul.mubr.f32.gmra.mxu0 %v631
        %v772 = vpop.f32.mrf.mxu0
        %v773 = vadd.f32 0.0, %v772
        %v774 = vpop.f32.mrf.mxu0
        %775 = vmatprep.mubr.f32.mxu0 0.0
        %776 = vmatmul.mubr.f32.gmra.mxu0 %v634
        %v777 = vpop.f32.mrf.mxu0
        %v778 = vadd.f32 0.0, %v777
        %v779 = vpop.f32.mrf.mxu0
        %780 = vmatprep.mubr.f32.mxu0 0.0
        %781 = vmatmul.mubr.f32.gmra.mxu0 %v637
        %v782 = vpop.f32.mrf.mxu0
        %v783 = vadd.f32 0.0, %v782
        %v784 = vpop.f32.mrf.mxu0
        %785 = vmatprep.mubr.f32.mxu0 0.0
        %786 = vmatmul.mubr.f32.gmra.mxu0 %v640
        %v787 = vpop.f32.mrf.mxu0
        %v788 = vadd.f32 0.0, %v787
        %v789 = vpop.f32.mrf.mxu0
        %790 = vdwg.mxu0
        %791 = vst.msk [vmem:[%s226] sm:$0xff] %vm593, %v713
        %792 = vst.msk [vmem:[%s226 + $0x8] sm:$0xff] %vm593, %v718
        %793 = vst.msk [vmem:[%s226 + $0x10] sm:$0xff] %vm593, %v723
        %794 = vst.msk [vmem:[%s226 + $0x18] sm:$0xff] %vm593, %v728
        %795 = vst.msk [vmem:[%s226 + $0x20] sm:$0xff] %vm593, %v733
        %796 = vst.msk [vmem:[%s226 + $0x28] sm:$0xff] %vm593, %v738
        %797 = vst.msk [vmem:[%s226 + $0x30] sm:$0xff] %vm593, %v743
        %798 = vst.msk [vmem:[%s226 + $0x38] sm:$0xff] %vm593, %v748
        %799 = vst.msk [vmem:[%s226 + $0x40] sm:$0xff] %vm593, %v753
        %800 = vst.msk [vmem:[%s226 + $0x48] sm:$0xff] %vm593, %v758
        %801 = vst.msk [vmem:[%s226 + $0x50] sm:$0xff] %vm593, %v763
        %802 = vst.msk [vmem:[%s226 + $0x58] sm:$0xff] %vm593, %v768
        %803 = vst.msk [vmem:[%s226 + $0x60] sm:$0xff] %vm593, %v773
        %804 = vst.msk [vmem:[%s226 + $0x68] sm:$0xff] %vm593, %v778
        %805 = vst.msk [vmem:[%s226 + $0x70] sm:$0xff] %vm593, %v783
        %806 = vst.msk [vmem:[%s226 + $0x78] sm:$0xff] %vm593, %v788
        %s807 = sand.u32 %s134, 1
        %s808 = sand.u32 %s134, 1
        %s809 = smul.addr %s808, 128
        %s810 = scalar_lea.vmem [#allocation2], %s809
        // Predicated region
        $region41: #{tpu_custom_call.1} parent=39 // pred_check
          %p811 = pneg %p144
        $region42: #{tpu_custom_call.1} parent=39 // pred_check_branch
          %813 = sbr.rel (%p811) target = $region44
        $region43: #{tpu_custom_call.1} parent=39 // pred_region
          %s814 = smul.u32 16, %s16
          %s815 = ssub.s32 25, %s814
          %p816 = scmp.lt.s32.totalorder %s815, 16
          %s817 = scalar_select %p816, %s815, 16
          %s818 = smul.u32 128, %s817
          %p819 = scmp.ne.s32.totalorder 0, %s818
          %s820 = smul.addr %s814, 8
          %s821 = scalar_lea.vmem %s5, %s820
          // Predicated region
          $region45: #{tpu_custom_call.1} parent=43 // pred_check
            %p822 = pneg %p819
          $region46: #{tpu_custom_call.1} parent=43 // pred_check_branch
            %824 = sbr.rel (%p822) target = $region48
          $region47: #{tpu_custom_call.1} parent=43 // pred_region
            // Predicated region
            $region49: #{tpu_custom_call.1} parent=47 // pred_check
              _
            $region50: #{tpu_custom_call.1} parent=47 // pred_check_branch
              %826 = sbr.rel (0) target = $region52
            $region51: #{tpu_custom_call.1} parent=47 // pred_region
              // Predicated region
              $region71: #{tpu_custom_call.1} parent=51 // pred_check
                _
              $region72: #{tpu_custom_call.1} parent=51 // pred_check_branch
                %906 = sbr.rel (0) target = $region74
              $region73: #{tpu_custom_call.1} parent=51 // pred_region
                %s907 = sshrl.u32 %s817, 4
                // While loop
                $region75: #{tpu_custom_call.1} parent=73 // loop_pre_header
                  _
                $region76: #{tpu_custom_call.1} parent=73 // loop_header
                  %s909 = sphi 0, %s911
                  %p910 = scmp.ge.s32.totalorder %s909, %s907
                  %s914 = sphi 0, %s951
                  %s915 = sphi %s810, %s954
                  %s916 = sphi %s821, %s955
                $region77: #{tpu_custom_call.1} parent=73 // loop_header_branch
                  %913 = sbr.rel (%p910) target = $region81
                $region78: #{tpu_custom_call.1} parent=73 // loop_body
                  %v917 = vld [vmem:[%s915] sm:$0xff]
                  %918 = vst [vmem:[%s916] sm:$0xff] %v917
                  %v919 = vld [vmem:[%s915 + $0x8] sm:$0xff]
                  %920 = vst [vmem:[%s916 + $0x8] sm:$0xff] %v919
                  %v921 = vld [vmem:[%s915 + $0x10] sm:$0xff]
                  %922 = vst [vmem:[%s916 + $0x10] sm:$0xff] %v921
                  %v923 = vld [vmem:[%s915 + $0x18] sm:$0xff]
                  %924 = vst [vmem:[%s916 + $0x18] sm:$0xff] %v923
                  %v925 = vld [vmem:[%s915 + $0x20] sm:$0xff]
                  %926 = vst [vmem:[%s916 + $0x20] sm:$0xff] %v925
                  %v927 = vld [vmem:[%s915 + $0x28] sm:$0xff]
                  %928 = vst [vmem:[%s916 + $0x28] sm:$0xff] %v927
                  %v929 = vld [vmem:[%s915 + $0x30] sm:$0xff]
                  %930 = vst [vmem:[%s916 + $0x30] sm:$0xff] %v929
                  %v931 = vld [vmem:[%s915 + $0x38] sm:$0xff]
                  %932 = vst [vmem:[%s916 + $0x38] sm:$0xff] %v931
                  %v933 = vld [vmem:[%s915 + $0x40] sm:$0xff]
                  %934 = vst [vmem:[%s916 + $0x40] sm:$0xff] %v933
                  %v935 = vld [vmem:[%s915 + $0x48] sm:$0xff]
                  %936 = vst [vmem:[%s916 + $0x48] sm:$0xff] %v935
                  %v937 = vld [vmem:[%s915 + $0x50] sm:$0xff]
                  %938 = vst [vmem:[%s916 + $0x50] sm:$0xff] %v937
                  %v939 = vld [vmem:[%s915 + $0x58] sm:$0xff]
                  %940 = vst [vmem:[%s916 + $0x58] sm:$0xff] %v939
                  %v941 = vld [vmem:[%s915 + $0x60] sm:$0xff]
                  %942 = vst [vmem:[%s916 + $0x60] sm:$0xff] %v941
                  %v943 = vld [vmem:[%s915 + $0x68] sm:$0xff]
                  %944 = vst [vmem:[%s916 + $0x68] sm:$0xff] %v943
                  %v945 = vld [vmem:[%s915 + $0x70] sm:$0xff]
                  %946 = vst [vmem:[%s916 + $0x70] sm:$0xff] %v945
                  %v947 = vld [vmem:[%s915 + $0x78] sm:$0xff]
                  %948 = vst [vmem:[%s916 + $0x78] sm:$0xff] %v947
                  %s949 = sadd.s32 1, %s914
                  %p950 = scmp.ge.s32.totalorder %s949, %s907
                  %s951 = scalar_select %p950, 0, %s949
                  %s952 = smul.u32 %s951, 128
                  %s953 = smul.u32 %s951, 128
                  %s954 = scalar_lea.vmem %s810, %s952 [#allocation2]
                  %s955 = scalar_lea.vmem %s821, %s953
                $region79: #{tpu_custom_call.1} parent=73 // loop_footer
                  %s911 = sadd.s32 %s909, 1
                $region80: #{tpu_custom_call.1} parent=73 // loop_footer_branch
                  %908 = sbr.rel target = $region76
                $region81: #{tpu_custom_call.1} parent=73 // loop_exit
                  _
                %s956 = sshrl.u32 %s817, 4
                %s957 = sand.u32 %s817, 15
                %s958 = smul.u32 %s956, 16
                %s959 = smul.u32 8, %s958
                %s960 = scalar_lea.vmem %s810, %s959 [#allocation2]
                %s961 = smul.u32 8, %s958
                %s962 = scalar_lea.vmem %s821, %s961
                // While loop
                $region82: #{tpu_custom_call.1} parent=73 // loop_pre_header
                  _
                $region83: #{tpu_custom_call.1} parent=73 // loop_header
                  %s964 = sphi 0, %s966
                  %p965 = scmp.ge.s32.totalorder %s964, %s957
                  %s969 = sphi 0, %s976
                  %s970 = sphi %s960, %s979
                  %s971 = sphi %s962, %s980
                $region84: #{tpu_custom_call.1} parent=73 // loop_header_branch
                  %968 = sbr.rel (%p965) target = $region88
                $region85: #{tpu_custom_call.1} parent=73 // loop_body
                  %v972 = vld [vmem:[%s970] sm:$0xff]
                  %973 = vst [vmem:[%s971] sm:$0xff] %v972
                  %s974 = sadd.s32 1, %s969
                  %p975 = scmp.ge.s32.totalorder %s974, %s957
                  %s976 = scalar_select %p975, 0, %s974
                  %s977 = smul.u32 %s976, 8
                  %s978 = smul.u32 %s976, 8
                  %s979 = scalar_lea.vmem %s960, %s977 [#allocation2]
                  %s980 = scalar_lea.vmem %s962, %s978
                $region86: #{tpu_custom_call.1} parent=73 // loop_footer
                  %s966 = sadd.s32 %s964, 1
                $region87: #{tpu_custom_call.1} parent=73 // loop_footer_branch
                  %963 = sbr.rel target = $region83
                $region88: #{tpu_custom_call.1} parent=73 // loop_exit
                  _
              $region74: #{tpu_custom_call.1} parent=51 // pred_fallthru
                _
              // Predicated region
              $region89: #{tpu_custom_call.1} parent=51 // pred_check
                _
              $region90: #{tpu_custom_call.1} parent=51 // pred_check_branch
                %982 = sbr.rel target = $region92
              $region91: #{tpu_custom_call.1} parent=51 // pred_region
                _
              $region92: #{tpu_custom_call.1} parent=51 // pred_fallthru
                _
            $region52: #{tpu_custom_call.1} parent=47 // pred_fallthru
              _
            // Predicated region
            $region53: #{tpu_custom_call.1} parent=47 // pred_check
              _
            $region54: #{tpu_custom_call.1} parent=47 // pred_check_branch
              %828 = sbr.rel target = $region56
            $region55: #{tpu_custom_call.1} parent=47 // pred_region
              %s830 = ssub.s32 256, 1
              %s831 = sshrl.u32 %s817, 4
              // While loop
              $region57: #{tpu_custom_call.1} parent=55 // loop_pre_header
                _
              $region58: #{tpu_custom_call.1} parent=55 // loop_header
                %s833 = sphi 0, %s835
                %p834 = scmp.ge.s32.totalorder %s833, %s831
                %s838 = sphi 0, %s875
                %s839 = sphi %s810, %s878
                %s840 = sphi %s821, %s879
              $region59: #{tpu_custom_call.1} parent=55 // loop_header_branch
                %837 = sbr.rel (%p834) target = $region63
              $region60: #{tpu_custom_call.1} parent=55 // loop_body
                %v841 = vld [vmem:[%s839] sm:%s830]
                %842 = vst [vmem:[%s840] sm:%s830] %v841
                %v843 = vld [vmem:[%s839 + $0x8] sm:%s830]
                %844 = vst [vmem:[%s840 + $0x8] sm:%s830] %v843
                %v845 = vld [vmem:[%s839 + $0x10] sm:%s830]
                %846 = vst [vmem:[%s840 + $0x10] sm:%s830] %v845
                %v847 = vld [vmem:[%s839 + $0x18] sm:%s830]
                %848 = vst [vmem:[%s840 + $0x18] sm:%s830] %v847
                %v849 = vld [vmem:[%s839 + $0x20] sm:%s830]
                %850 = vst [vmem:[%s840 + $0x20] sm:%s830] %v849
                %v851 = vld [vmem:[%s839 + $0x28] sm:%s830]
                %852 = vst [vmem:[%s840 + $0x28] sm:%s830] %v851
                %v853 = vld [vmem:[%s839 + $0x30] sm:%s830]
                %854 = vst [vmem:[%s840 + $0x30] sm:%s830] %v853
                %v855 = vld [vmem:[%s839 + $0x38] sm:%s830]
                %856 = vst [vmem:[%s840 + $0x38] sm:%s830] %v855
                %v857 = vld [vmem:[%s839 + $0x40] sm:%s830]
                %858 = vst [vmem:[%s840 + $0x40] sm:%s830] %v857
                %v859 = vld [vmem:[%s839 + $0x48] sm:%s830]
                %860 = vst [vmem:[%s840 + $0x48] sm:%s830] %v859
                %v861 = vld [vmem:[%s839 + $0x50] sm:%s830]
                %862 = vst [vmem:[%s840 + $0x50] sm:%s830] %v861
                %v863 = vld [vmem:[%s839 + $0x58] sm:%s830]
                %864 = vst [vmem:[%s840 + $0x58] sm:%s830] %v863
                %v865 = vld [vmem:[%s839 + $0x60] sm:%s830]
                %866 = vst [vmem:[%s840 + $0x60] sm:%s830] %v865
                %v867 = vld [vmem:[%s839 + $0x68] sm:%s830]
                %868 = vst [vmem:[%s840 + $0x68] sm:%s830] %v867
                %v869 = vld [vmem:[%s839 + $0x70] sm:%s830]
                %870 = vst [vmem:[%s840 + $0x70] sm:%s830] %v869
                %v871 = vld [vmem:[%s839 + $0x78] sm:%s830]
                %872 = vst [vmem:[%s840 + $0x78] sm:%s830] %v871
                %s873 = sadd.s32 1, %s838
                %p874 = scmp.ge.s32.totalorder %s873, %s831
                %s875 = scalar_select %p874, 0, %s873
                %s876 = smul.u32 %s875, 128
                %s877 = smul.u32 %s875, 128
                %s878 = scalar_lea.vmem %s810, %s876 [#allocation2]
                %s879 = scalar_lea.vmem %s821, %s877
              $region61: #{tpu_custom_call.1} parent=55 // loop_footer
                %s835 = sadd.s32 %s833, 1
              $region62: #{tpu_custom_call.1} parent=55 // loop_footer_branch
                %832 = sbr.rel target = $region58
              $region63: #{tpu_custom_call.1} parent=55 // loop_exit
                _
              %s880 = sshrl.u32 %s817, 4
              %s881 = sand.u32 %s817, 15
              %s882 = smul.u32 %s880, 16
              %s883 = smul.u32 8, %s882
              %s884 = scalar_lea.vmem %s810, %s883 [#allocation2]
              %s885 = smul.u32 8, %s882
              %s886 = scalar_lea.vmem %s821, %s885
              // While loop
              $region64: #{tpu_custom_call.1} parent=55 // loop_pre_header
                _
              $region65: #{tpu_custom_call.1} parent=55 // loop_header
                %s888 = sphi 0, %s890
                %p889 = scmp.ge.s32.totalorder %s888, %s881
                %s893 = sphi 0, %s900
                %s894 = sphi %s884, %s903
                %s895 = sphi %s886, %s904
              $region66: #{tpu_custom_call.1} parent=55 // loop_header_branch
                %892 = sbr.rel (%p889) target = $region70
              $region67: #{tpu_custom_call.1} parent=55 // loop_body
                %v896 = vld [vmem:[%s894] sm:%s830]
                %897 = vst [vmem:[%s895] sm:%s830] %v896
                %s898 = sadd.s32 1, %s893
                %p899 = scmp.ge.s32.totalorder %s898, %s881
                %s900 = scalar_select %p899, 0, %s898
                %s901 = smul.u32 %s900, 8
                %s902 = smul.u32 %s900, 8
                %s903 = scalar_lea.vmem %s884, %s901 [#allocation2]
                %s904 = scalar_lea.vmem %s886, %s902
              $region68: #{tpu_custom_call.1} parent=55 // loop_footer
                %s890 = sadd.s32 %s888, 1
              $region69: #{tpu_custom_call.1} parent=55 // loop_footer_branch
                %887 = sbr.rel target = $region65
              $region70: #{tpu_custom_call.1} parent=55 // loop_exit
                _
            $region56: #{tpu_custom_call.1} parent=47 // pred_fallthru
              _
          $region48: #{tpu_custom_call.1} parent=43 // pred_fallthru
            _
          %983 = vnop
        $region44: #{tpu_custom_call.1} parent=39 // pred_fallthru
          _
      $region40: #{tpu_custom_call.1} parent=5 // pred_fallthru
        _
      %p984 = scmp.le.s32.totalorder 2, %s11
      // Predicated region
      $region93: #{tpu_custom_call.1} parent=5 // pred_check
        %p985 = pneg %p984
      $region94: #{tpu_custom_call.1} parent=5 // pred_check_branch
        %987 = sbr.rel (%p985) target = $region96
      $region95: #{tpu_custom_call.1} parent=5 // pred_region
        %s988 = ssub.s32 %s11, 2
        // Predicated region
        $region97: #{tpu_custom_call.1} parent=95 // pred_check
          %p989 = pneg %p150
        $region98: #{tpu_custom_call.1} parent=95 // pred_check_branch
          %991 = sbr.rel (%p989) target = $region100
        $region99: #{tpu_custom_call.1} parent=95 // pred_region
          %s992 = sand.u32 %s135, 1
          %s993 = sand.u32 %s135, 1
          %s994 = smul.addr %s993, 128
          %s995 = scalar_lea.vmem [#allocation2], %s994
        $region100: #{tpu_custom_call.1} parent=95 // pred_fallthru
          _
      $region96: #{tpu_custom_call.1} parent=5 // pred_fallthru
        _
    $region6: #{tpu_custom_call.1} parent=1 // loop_footer
      %s15 = sadd.s32 1, %s11
    $region7: #{tpu_custom_call.1} parent=1 // loop_footer_branch
      %10 = sbr.rel target = $region3
    $region8: #{tpu_custom_call.1} parent=1 // loop_exit
      _

</llo_original>
